<compile_context>
chip_gen: v7x
topology: tpu7x:2x2x1
jax: 0.10.0
libtpu: 0.0.40
codegen_flags: <defaults>
</compile_context>

<pallas_src>
import math
import jax
import jax.numpy as jnp
from jax import lax
from jax.experimental import pallas as pl
from jax.experimental.pallas import tpu as pltpu

# ---- small config, structurally consistent with CustomSwinSegModel ----
BATCH = 2
IN_CHANS = 3                                     # dim=3 (default)
IMG = 32                                         # input spatial size (real: 256)
EMBED_DIM = 8                                    # real swinv2_tiny: 96
NUM_LAYERS = 4
NUM_FEATURES = EMBED_DIM * 2 ** (NUM_LAYERS - 1) # 64   (real: 768)
UPSCALE = 8                                      # real: 32 ; feature grid = IMG // UPSCALE
FEAT_HW = IMG // UPSCALE                         # 4
SEQ_LEN = FEAT_HW * FEAT_HW                      # 16   (sequence_length in forward)
PATCH = UPSCALE                                  # patchify so token grid == feature grid
PATCH_DIM = IN_CHANS * PATCH * PATCH             # 192
DEC_OUT = NUM_FEATURES * NUM_LAYERS              # 256  (decoder 1x1 conv out-channels)
OUT_CHANS = DEC_OUT // (UPSCALE * UPSCALE)       # 4    (channels after PixelShuffle)

# lane-dense padded widths (multiples of 128)
PATCH_DIM_PAD = 256                              # K: 192 -> 256 (zero-padded)
FEAT_PAD = 128                                   # C: 64  -> 128 (zero-padded)


def _swin_seg_kernel(patch_ref, we_ref, be_ref, wd_ref, bd_ref, out_ref):
    # ---- backbone stand-in: patch-embedding projection (bf16 MXU, f32 accum) ----
    tok = jnp.dot(patch_ref[...], we_ref[...], preferred_element_type=jnp.float32)
    tok = tok + be_ref[...]
    # TODO(synk): pretrained timm SwinV2 window-attention / patch-merging stages cannot be
    # reproduced without checkpoint weights; backbone here is a patch-embed projection +
    # final LayerNorm producing the same (tokens, NUM_FEATURES) shape.
    # LayerNorm over the real NUM_FEATURES channels, in f32. Padded channels of `tok`
    # are exactly zero (zero-padded we columns / be), so lane reductions over the padded
    # width equal sums over the real channels; E[x^2]-mu^2 keeps padding out of the stats.
    inv_n = 1.0 / NUM_FEATURES
    s1 = jnp.sum(tok, axis=-1, keepdims=True)            # XLU cross-lane reduce
    s2 = jnp.sum(tok * tok, axis=-1, keepdims=True)
    mu = s1 * inv_n
    var = s2 * inv_n - mu * mu
    norm = (tok - mu) * lax.rsqrt(var + 1e-5)             # rsqrt -> EUP (free slot)
    # ---- decoder: 1x1 Conv2d == per-token matmul (MXU). LN affine (gamma/beta) is folded
    # into wd/bd at init; padded rows of wd are zero so the garbage padded columns of
    # `norm` contribute nothing.
    y = jnp.dot(norm.astype(wd_ref.dtype), wd_ref[...], preferred_element_type=jnp.float32)
    y = y + bd_ref[...]
    out_ref[...] = y.astype(out_ref.dtype)                # 256-wide unmasked vst


def swin_seg_forward(x_nchw, params):
    we, be, wd, bd = params
    B = x_nchw.shape[0]
    n_tok = B * SEQ_LEN

    # patchify (glue): NCHW -> (B*L, C*ph*pw), flatten order (c, ph, pw) like a PyTorch conv
    x = x_nchw.reshape(B, IN_CHANS, FEAT_HW, PATCH, FEAT_HW, PATCH)
    x = jnp.transpose(x, (0, 2, 4, 1, 3, 5))              # (B, Hf, Wf, C, ph, pw)
    patches = x.reshape(n_tok, PATCH_DIM)
    # zero-pad K to 256 for unmasked lane loads / clean MXU K-tiling; bf16 matmul operand
    patches = jnp.pad(patches, ((0, 0), (0, PATCH_DIM_PAD - PATCH_DIM))).astype(jnp.bfloat16)

    # single grid step: all B*L tokens in one tile (avoids per-step pipeline overhead)
    y = pl.pallas_call(
        _swin_seg_kernel,
        out_shape=jax.ShapeDtypeStruct((n_tok, DEC_OUT), jnp.float32),
        grid=(1,),
        in_specs=[
            pl.BlockSpec((n_tok, PATCH_DIM_PAD), lambda i: (0, 0)),
            pl.BlockSpec((PATCH_DIM_PAD, FEAT_PAD), lambda i: (0, 0)),
            pl.BlockSpec((1, FEAT_PAD), lambda i: (0, 0)),
            pl.BlockSpec((FEAT_PAD, DEC_OUT), lambda i: (0, 0)),
            pl.BlockSpec((1, DEC_OUT), lambda i: (0, 0)),
        ],
        out_specs=pl.BlockSpec((n_tok, DEC_OUT), lambda i: (0, 0)),
        compiler_params=pltpu.CompilerParams(dimension_semantics=("arbitrary",)),
    )(patches, we, be, wd, bd)

    # forward glue, matching the PyTorch module exactly:
    #   tokens (B*L, C4) == NCHW conv output (B, C4, H, W) with L = h*W + w
    #   PixelShuffle(r): out[b, c, h*r+i, w*r+j] = conv[b, c*r*r + i*r + j, h, w]
    y = y.reshape(B, FEAT_HW, FEAT_HW, OUT_CHANS, UPSCALE, UPSCALE)
    y = jnp.transpose(y, (0, 3, 1, 4, 2, 5))
    y = y.reshape(B, OUT_CHANS, FEAT_HW * UPSCALE, FEAT_HW * UPSCALE)
    return y


def init_params():
    key = jax.random.PRNGKey(0)
    k = jax.random.split(key, 5)
    we = jax.random.normal(k[0], (PATCH_DIM, NUM_FEATURES), jnp.float32) * 0.02
    be = jax.random.normal(k[1], (1, NUM_FEATURES), jnp.float32) * 0.02
    gamma = jnp.ones((NUM_FEATURES,), jnp.float32)
    beta = jnp.zeros((NUM_FEATURES,), jnp.float32)
    wd = jax.random.normal(k[2], (NUM_FEATURES, DEC_OUT), jnp.float32) * (1.0 / math.sqrt(NUM_FEATURES))
    bd = jax.random.normal(k[3], (1, DEC_OUT), jnp.float32) * 0.02

    # Fold LN affine into the (linear) decoder, in f32 at init:
    #   y = (norm*gamma + beta) @ wd + bd = norm @ (gamma[:,None]*wd) + (beta @ wd + bd)
    wd_fold = gamma[:, None] * wd
    bd_fold = beta[None, :] @ wd + bd

    # Zero-pad to lane-dense widths (K 192->256, C 64->128); cast matmul operands to bf16,
    # keep biases in f32 (added to f32 accumulators).
    we_p = jnp.zeros((PATCH_DIM_PAD, FEAT_PAD), jnp.float32).at[:PATCH_DIM, :NUM_FEATURES].set(we)
    be_p = jnp.zeros((1, FEAT_PAD), jnp.float32).at[:, :NUM_FEATURES].set(be)
    wd_p = jnp.zeros((FEAT_PAD, DEC_OUT), jnp.float32).at[:NUM_FEATURES, :].set(wd_fold)

    params = (we_p.astype(jnp.bfloat16), be_p, wd_p.astype(jnp.bfloat16), bd_fold)
    return params, k[4]


if __name__ == "__main__":
    params, xkey = init_params()
    x = jax.random.normal(xkey, (BATCH, IN_CHANS, IMG, IMG), jnp.float32)  # NCHW, like PyTorch
    out = jax.block_until_ready(swin_seg_forward(x, params))
    assert out.shape == (BATCH, OUT_CHANS, IMG, IMG), out.shape
    assert out.dtype == jnp.float32
    print("KERNEL_OK")
</pallas_src>

<mosaic_0001>
module attributes {stable_mosaic.version = 11 : i64} {
  func.func @_swin_seg_kernel(%arg0: i32, %arg1: memref<32x256xbf16, #tpu.memory_space<vmem>>, %arg2: memref<256x128xbf16, #tpu.memory_space<vmem>>, %arg3: memref<1x128xf32, #tpu.memory_space<vmem>>, %arg4: memref<128x256xbf16, #tpu.memory_space<vmem>>, %arg5: memref<1x256xf32, #tpu.memory_space<vmem>>, %arg6: memref<32x256xf32, #tpu.memory_space<vmem>>) attributes {dimension_semantics = [#tpu.dimension_semantics<arbitrary>], iteration_bounds = array<i64: 1>, scalar_prefetch = 0 : i64, scratch_operands = 0 : i64, tpu.core_type = #tpu.core_type<tc>, window_params = [{pipeline_mode = #tpu.pipeline_mode<synchronous>, transform_indices = @transform_0, window_bounds = array<i64: 32, 256>}, {pipeline_mode = #tpu.pipeline_mode<synchronous>, transform_indices = @transform_1, window_bounds = array<i64: 256, 128>}, {pipeline_mode = #tpu.pipeline_mode<synchronous>, transform_indices = @transform_2, window_bounds = array<i64: 1, 128>}, {pipeline_mode = #tpu.pipeline_mode<synchronous>, transform_indices = @transform_3, window_bounds = array<i64: 128, 256>}, {pipeline_mode = #tpu.pipeline_mode<synchronous>, transform_indices = @transform_4, window_bounds = array<i64: 1, 256>}, {pipeline_mode = #tpu.pipeline_mode<synchronous>, transform_indices = @transform_5, window_bounds = array<i64: 32, 256>}]} {
    %c0 = arith.constant 0 : index
    %c0_0 = arith.constant 0 : index
    %0 = vector.load %arg1[%c0, %c0_0] : memref<32x256xbf16, #tpu.memory_space<vmem>>, vector<32x256xbf16>
    %c0_1 = arith.constant 0 : index
    %c0_2 = arith.constant 0 : index
    %1 = vector.load %arg2[%c0_1, %c0_2] : memref<256x128xbf16, #tpu.memory_space<vmem>>, vector<256x128xbf16>
    %cst = arith.constant dense<0.000000e+00> : vector<32x128xf32>
    %2 = tpu.matmul %0, %1, %cst {dimension_numbers = #tpu.dot_dimension_numbers<[1], [0], [0], [1], [0, 0, 1, 1], [], []>} : vector<32x256xbf16>, vector<256x128xbf16>, vector<32x128xf32> -> vector<32x128xf32>
    %c0_3 = arith.constant 0 : index
    %c0_4 = arith.constant 0 : index
    %3 = vector.load %arg3[%c0_3, %c0_4] : memref<1x128xf32, #tpu.memory_space<vmem>>, vector<1x128xf32>
    %4 = vector.broadcast %3 : vector<1x128xf32> to vector<32x128xf32>
    %5 = arith.addf %2, %4 : vector<32x128xf32>
    %cst_5 = arith.constant dense<0.000000e+00> : vector<32xf32>
    %6 = vector.multi_reduction <add>, %5, %cst_5 [1] : vector<32x128xf32> to vector<32xf32>
    %7 = vector.shape_cast %6 : vector<32xf32> to vector<32x1xf32>
    %8 = arith.mulf %5, %5 : vector<32x128xf32>
    %cst_6 = arith.constant dense<0.000000e+00> : vector<32xf32>
    %9 = vector.multi_reduction <add>, %8, %cst_6 [1] : vector<32x128xf32> to vector<32xf32>
    %10 = vector.shape_cast %9 : vector<32xf32> to vector<32x1xf32>
    %cst_7 = arith.constant 1.562500e-02 : f32
    %11 = vector.broadcast %cst_7 : f32 to vector<32x1xf32>
    %12 = arith.mulf %7, %11 : vector<32x1xf32>
    %cst_8 = arith.constant 1.562500e-02 : f32
    %13 = vector.broadcast %cst_8 : f32 to vector<32x1xf32>
    %14 = arith.mulf %10, %13 : vector<32x1xf32>
    %15 = arith.mulf %12, %12 : vector<32x1xf32>
    %16 = arith.subf %14, %15 : vector<32x1xf32>
    %17 = vector.broadcast %12 : vector<32x1xf32> to vector<32x128xf32>
    %18 = arith.subf %5, %17 : vector<32x128xf32>
    %cst_9 = arith.constant 9.99999974E-6 : f32
    %19 = vector.broadcast %cst_9 : f32 to vector<32x1xf32>
    %20 = arith.addf %16, %19 : vector<32x1xf32>
    %21 = math.rsqrt %20 : vector<32x1xf32>
    %22 = vector.broadcast %21 : vector<32x1xf32> to vector<32x128xf32>
    %23 = arith.mulf %18, %22 : vector<32x128xf32>
    %24 = arith.truncf %23 : vector<32x128xf32> to vector<32x128xbf16>
    %c0_10 = arith.constant 0 : index
    %c0_11 = arith.constant 0 : index
    %25 = vector.load %arg4[%c0_10, %c0_11] : memref<128x256xbf16, #tpu.memory_space<vmem>>, vector<128x256xbf16>
    %cst_12 = arith.constant dense<0.000000e+00> : vector<32x256xf32>
    %26 = tpu.matmul %24, %25, %cst_12 {dimension_numbers = #tpu.dot_dimension_numbers<[1], [0], [0], [1], [0, 0, 1, 1], [], []>} : vector<32x128xbf16>, vector<128x256xbf16>, vector<32x256xf32> -> vector<32x256xf32>
    %c0_13 = arith.constant 0 : index
    %c0_14 = arith.constant 0 : index
    %27 = vector.load %arg5[%c0_13, %c0_14] : memref<1x256xf32, #tpu.memory_space<vmem>>, vector<1x256xf32>
    %28 = vector.broadcast %27 : vector<1x256xf32> to vector<32x256xf32>
    %29 = arith.addf %26, %28 : vector<32x256xf32>
    %c0_15 = arith.constant 0 : index
    %c0_16 = arith.constant 0 : index
    %30 = vector.load %arg6[%c0_15, %c0_16] : memref<32x256xf32, #tpu.memory_space<vmem>>, vector<32x256xf32>
    tpu.vector_store %arg6[%c0_15, %c0_16], %29 {strides = array<i32>} : memref<32x256xf32, #tpu.memory_space<vmem>>, vector<32x256xf32>,
    return
  }
  func.func @transform_0(%arg0: i32) -> (i32, i32) {
    %c0_i32 = arith.constant 0 : i32
    %c0_i32_0 = arith.constant 0 : i32
    %c0_i32_1 = arith.constant 0 : i32
    return %c0_i32, %c0_i32_0 : i32, i32
  }
  func.func @transform_1(%arg0: i32) -> (i32, i32) {
    %c0_i32 = arith.constant 0 : i32
    %c0_i32_0 = arith.constant 0 : i32
    %c0_i32_1 = arith.constant 0 : i32
    return %c0_i32, %c0_i32_0 : i32, i32
  }
  func.func @transform_2(%arg0: i32) -> (i32, i32) {
    %c0_i32 = arith.constant 0 : i32
    %c0_i32_0 = arith.constant 0 : i32
    %c0_i32_1 = arith.constant 0 : i32
    return %c0_i32, %c0_i32_0 : i32, i32
  }
  func.func @transform_3(%arg0: i32) -> (i32, i32) {
    %c0_i32 = arith.constant 0 : i32
    %c0_i32_0 = arith.constant 0 : i32
    %c0_i32_1 = arith.constant 0 : i32
    return %c0_i32, %c0_i32_0 : i32, i32
  }
  func.func @transform_4(%arg0: i32) -> (i32, i32) {
    %c0_i32 = arith.constant 0 : i32
    %c0_i32_0 = arith.constant 0 : i32
    %c0_i32_1 = arith.constant 0 : i32
    return %c0_i32, %c0_i32_0 : i32, i32
  }
  func.func @transform_5(%arg0: i32) -> (i32, i32) {
    %c0_i32 = arith.constant 0 : i32
    %c0_i32_0 = arith.constant 0 : i32
    %c0_i32_1 = arith.constant 0 : i32
    return %c0_i32, %c0_i32_0 : i32, i32
  }
}

</mosaic_0001>

<llo_original>
// kernel: tpu_custom_call.1
$region0: #{tpu_custom_call.1}
  #allocation0 [shape = 'u32[]', space=smem, size = 0x4, offset = 0x4, fixed_abs, tag = 'smem constant byte address 0x4 - core index']
  #allocation1 [shape = 'u32[144,128]{1,0:T(1,128)}', space=vmem, size = 0x12000, scoped, tag = 'internal scratch']
  %s0 = inlined_call_operand.hbm [shape: bf16[32,256], index: 0, kind: input, shape index: {}]
  %s1 = inlined_call_operand.hbm [shape: bf16[256,128], index: 1, kind: input, shape index: {}]
  %s2 = inlined_call_operand.vmem [shape: f32[1,128], index: 2, kind: input, shape index: {}]
  %s3 = inlined_call_operand.hbm [shape: bf16[128,256], index: 3, kind: input, shape index: {}]
  %s4 = inlined_call_operand.vmem [shape: f32[1,256], index: 4, kind: input, shape index: {}]
  %s5 = inlined_call_operand.hbm [shape: f32[32,256], index: 5, kind: output, shape index: {}]
  %s6 = sld [smem:[#allocation0]]
  $region42: #{tpu_custom_call.1} parent=0
    _
  %s8 = ssub.s32 1, %s6
  %s9 = scalar_select 0, %s8, %s6
  $region1: #{tpu_custom_call.1} parent=0
    #allocation2 [shape = 'u8[16384]{0}', space=vmem, size = 0x4000, scoped, tag = 'input window, operand 0, single buffered']
    #allocation3 [shape = 's32[1]{0}', space=sflag, size = 0x4, scoped, tag = 'scoped memory for tpu_custom_call.1']
    #allocation4 [shape = 's32[1]{0}', space=sflag, size = 0x4, scoped, tag = 'scoped memory for tpu_custom_call.1']
    #allocation5 [shape = 'u8[65536]{0}', space=vmem, size = 0x10000, scoped, tag = 'input window, operand 1, single buffered']
    #allocation6 [shape = 's32[1]{0}', space=sflag, size = 0x4, scoped, tag = 'scoped memory for tpu_custom_call.1']
    #allocation7 [shape = 'u8[65536]{0}', space=vmem, size = 0x10000, scoped, tag = 'input window, operand 3, single buffered']
    #allocation8 [shape = 'u8[32768]{0}', space=vmem, size = 0x8000, scoped, tag = 'output window, operand 0, single buffered']
    %10 = vsyncpa [#allocation3], 0
    %11 = vsyncpa [#allocation6], 0
    %12 = vsyncpa [#allocation4], 0
    // Predicated region
    $region2: #{tpu_custom_call.1} parent=1 // pred_check
      _
    $region3: #{tpu_custom_call.1} parent=1 // pred_check_branch
      %14 = sbr.rel (0) target = $region5
    $region4: #{tpu_custom_call.1} parent=1 // pred_region
      %s16 = ssub.s32 512, 512
      %17 = vsyncadd [#allocation3], %s16
      %s18 = sshll.u32 [#allocation2], 4
      %s19 = int_to_ptr.vmem [resolvable:$true] %s18
      %24 = dma.hbm_to_vmem [thread:$0]  %s0, 512, %s19, [#allocation3], 128, 128, 8
    $region5: #{tpu_custom_call.1} parent=1 // pred_fallthru
      _
    // Predicated region
    $region6: #{tpu_custom_call.1} parent=1 // pred_check
      _
    $region7: #{tpu_custom_call.1} parent=1 // pred_check_branch
      %26 = sbr.rel (0) target = $region9
    $region8: #{tpu_custom_call.1} parent=1 // pred_region
      %s28 = ssub.s32 2048, 2048
      %29 = vsyncadd [#allocation6], %s28
      %s30 = sshll.u32 [#allocation5], 4
      %s31 = int_to_ptr.vmem [resolvable:$true] %s30
      %36 = dma.hbm_to_vmem [thread:$0]  %s1, 2048, %s31, [#allocation6], 64, 64, 4
    $region9: #{tpu_custom_call.1} parent=1 // pred_fallthru
      _
    // Predicated region
    $region10: #{tpu_custom_call.1} parent=1 // pred_check
      _
    $region11: #{tpu_custom_call.1} parent=1 // pred_check_branch
      %38 = sbr.rel (0) target = $region13
    $region12: #{tpu_custom_call.1} parent=1 // pred_region
      _
    $region13: #{tpu_custom_call.1} parent=1 // pred_fallthru
      _
    // Predicated region
    $region14: #{tpu_custom_call.1} parent=1 // pred_check
      _
    $region15: #{tpu_custom_call.1} parent=1 // pred_check_branch
      %40 = sbr.rel (0) target = $region17
    $region16: #{tpu_custom_call.1} parent=1 // pred_region
      %s42 = ssub.s32 2048, 2048
      %43 = vsyncadd [#allocation6], %s42
      %s44 = sshll.u32 [#allocation7], 4
      %s45 = int_to_ptr.vmem [resolvable:$true] %s44
      %50 = dma.hbm_to_vmem [thread:$0]  %s3, 2048, %s45, [#allocation6], 128, 128, 8
    $region17: #{tpu_custom_call.1} parent=1 // pred_fallthru
      _
    // Predicated region
    $region18: #{tpu_custom_call.1} parent=1 // pred_check
      _
    $region19: #{tpu_custom_call.1} parent=1 // pred_check_branch
      %52 = sbr.rel (0) target = $region21
    $region20: #{tpu_custom_call.1} parent=1 // pred_region
      _
    $region21: #{tpu_custom_call.1} parent=1 // pred_fallthru
      _
    // Predicated region
    $region22: #{tpu_custom_call.1} parent=1 // pred_check
      _
    $region23: #{tpu_custom_call.1} parent=1 // pred_check_branch
      %54 = sbr.rel (0) target = $region25
    $region24: #{tpu_custom_call.1} parent=1 // pred_region
      %55 = dma.done [#allocation3], 512
    $region25: #{tpu_custom_call.1} parent=1 // pred_fallthru
      _
    // Predicated region
    $region26: #{tpu_custom_call.1} parent=1 // pred_check
      _
    $region27: #{tpu_custom_call.1} parent=1 // pred_check_branch
      %57 = sbr.rel (0) target = $region29
    $region28: #{tpu_custom_call.1} parent=1 // pred_region
      %58 = dma.done [#allocation6], 2048
    $region29: #{tpu_custom_call.1} parent=1 // pred_fallthru
      _
    // Predicated region
    $region30: #{tpu_custom_call.1} parent=1 // pred_check
      _
    $region31: #{tpu_custom_call.1} parent=1 // pred_check_branch
      %60 = sbr.rel (0) target = $region33
    $region32: #{tpu_custom_call.1} parent=1 // pred_region
      %61 = dma.done [#allocation6], 2048
    $region33: #{tpu_custom_call.1} parent=1 // pred_fallthru
      _
    %v63 = vld [vmem:[#allocation2] sm:$0xff]
    %v64 = vld [vmem:[#allocation2 + $0x8] sm:$0xff]
    %v65 = vld [vmem:[#allocation2 + $0x10] sm:$0xff]
    %v66 = vld [vmem:[#allocation2 + $0x18] sm:$0xff]
    %v67 = vld [vmem:[#allocation5] sm:$0xf]
    %v68 = vld [vmem:[#allocation5 + $0x4] sm:$0xf]
    %v69 = vld [vmem:[#allocation5 + $0x8] sm:$0xf]
    %v70 = vld [vmem:[#allocation5 + $0xc] sm:$0xf]
    %v71 = vld [vmem:[#allocation5 + $0x10] sm:$0xf]
    %v72 = vld [vmem:[#allocation5 + $0x14] sm:$0xf]
    %v73 = vld [vmem:[#allocation5 + $0x18] sm:$0xf]
    %v74 = vld [vmem:[#allocation5 + $0x1c] sm:$0xf]
    %v75 = vld [vmem:[#allocation5 + $0x20] sm:$0xf]
    %v76 = vld [vmem:[#allocation5 + $0x24] sm:$0xf]
    %v77 = vld [vmem:[#allocation5 + $0x28] sm:$0xf]
    %v78 = vld [vmem:[#allocation5 + $0x2c] sm:$0xf]
    %v79 = vld [vmem:[#allocation5 + $0x30] sm:$0xf]
    %v80 = vld [vmem:[#allocation5 + $0x34] sm:$0xf]
    %v81 = vld [vmem:[#allocation5 + $0x38] sm:$0xf]
    %v82 = vld [vmem:[#allocation5 + $0x3c] sm:$0xf]
    %v83 = vld [vmem:[#allocation5 + $0x40] sm:$0xf]
    %v84 = vld [vmem:[#allocation5 + $0x44] sm:$0xf]
    %v85 = vld [vmem:[#allocation5 + $0x48] sm:$0xf]
    %v86 = vld [vmem:[#allocation5 + $0x4c] sm:$0xf]
    %v87 = vld [vmem:[#allocation5 + $0x50] sm:$0xf]
    %v88 = vld [vmem:[#allocation5 + $0x54] sm:$0xf]
    %v89 = vld [vmem:[#allocation5 + $0x58] sm:$0xf]
    %v90 = vld [vmem:[#allocation5 + $0x5c] sm:$0xf]
    %v91 = vld [vmem:[#allocation5 + $0x60] sm:$0xf]
    %v92 = vld [vmem:[#allocation5 + $0x64] sm:$0xf]
    %v93 = vld [vmem:[#allocation5 + $0x68] sm:$0xf]
    %v94 = vld [vmem:[#allocation5 + $0x6c] sm:$0xf]
    %v95 = vld [vmem:[#allocation5 + $0x70] sm:$0xf]
    %v96 = vld [vmem:[#allocation5 + $0x74] sm:$0xf]
    %v97 = vld [vmem:[#allocation5 + $0x78] sm:$0xf]
    %v98 = vld [vmem:[#allocation5 + $0x7c] sm:$0xf]
    %v99 = vld [vmem:[%s2] sm:$0x1]
    %v101 = vlaneseq
    %v102 = vshrl.u32 %v101, 7
    %v103 = vsub.s32 0, %v102
    %v104 = vrot.slane %v99, %v103
    %v110 = vunpack.c.l.b16 %v63
    %v111 = vunpack.c.h.b16 %v63
    %v112 = vunpack.c.l.b16 %v64
    %v113 = vunpack.c.h.b16 %v64
    %v114 = vunpack.c.l.b16 %v65
    %v115 = vunpack.c.h.b16 %v65
    %v116 = vunpack.c.l.b16 %v66
    %v117 = vunpack.c.h.b16 %v66
    %v118 = vpack.c.b16 %v112, %v110
    %v119 = vpack.c.b16 %v113, %v111
    %v120 = vpack.c.b16 %v116, %v114
    %v121 = vpack.c.b16 %v117, %v115
    %v158 = vunpack.c.l.b16 %v67
    %v159 = vunpack.c.l.b16 %v68
    %v160 = vunpack.c.l.b16 %v69
    %v161 = vunpack.c.l.b16 %v70
    %v162 = vunpack.c.l.b16 %v71
    %v163 = vunpack.c.l.b16 %v72
    %v164 = vunpack.c.l.b16 %v73
    %v165 = vunpack.c.l.b16 %v74
    %v166 = vunpack.c.l.b16 %v75
    %v167 = vunpack.c.l.b16 %v76
    %v168 = vunpack.c.l.b16 %v77
    %v169 = vunpack.c.l.b16 %v78
    %v170 = vunpack.c.l.b16 %v79
    %v171 = vunpack.c.l.b16 %v80
    %v172 = vunpack.c.l.b16 %v81
    %v173 = vunpack.c.l.b16 %v82
    %v174 = vunpack.c.l.b16 %v83
    %v175 = vunpack.c.l.b16 %v84
    %v176 = vunpack.c.l.b16 %v85
    %v177 = vunpack.c.l.b16 %v86
    %v178 = vunpack.c.l.b16 %v87
    %v179 = vunpack.c.l.b16 %v88
    %v180 = vunpack.c.l.b16 %v89
    %v181 = vunpack.c.l.b16 %v90
    %v182 = vunpack.c.l.b16 %v91
    %v183 = vunpack.c.l.b16 %v92
    %v184 = vunpack.c.l.b16 %v93
    %v185 = vunpack.c.l.b16 %v94
    %v186 = vunpack.c.l.b16 %v95
    %v187 = vunpack.c.l.b16 %v96
    %v188 = vunpack.c.l.b16 %v97
    %v189 = vunpack.c.l.b16 %v98
    %v190 = vpack.c.b16 %v159, %v158
    %v191 = vpack.c.b16 %v161, %v160
    %v192 = vpack.c.b16 %v163, %v162
    %v193 = vpack.c.b16 %v165, %v164
    %v194 = vpack.c.b16 %v167, %v166
    %v195 = vpack.c.b16 %v169, %v168
    %v196 = vpack.c.b16 %v171, %v170
    %v197 = vpack.c.b16 %v173, %v172
    %v198 = vpack.c.b16 %v175, %v174
    %v199 = vpack.c.b16 %v177, %v176
    %v200 = vpack.c.b16 %v179, %v178
    %v201 = vpack.c.b16 %v181, %v180
    %v202 = vpack.c.b16 %v183, %v182
    %v203 = vpack.c.b16 %v185, %v184
    %v204 = vpack.c.b16 %v187, %v186
    %v205 = vpack.c.b16 %v189, %v188
    %222 = vmatprep.subr.bf16.mxu0 0
    %223 = vmatpush1.bf16.msra.mxu0 %v190
    %224 = vmatprep.subr.bf16.mxu0 0
    %225 = vmatpush1.bf16.msra.mxu0 %v191
    %226 = vmatprep.subr.bf16.mxu0 0
    %227 = vmatpush1.bf16.msra.mxu0 %v192
    %228 = vmatprep.subr.bf16.mxu0 0
    %229 = vmatpush1.bf16.msra.mxu0 %v193
    %230 = vmatprep.subr.bf16.mxu0 0
    %231 = vmatpush1.bf16.msra.mxu0 %v194
    %232 = vmatprep.subr.bf16.mxu0 0
    %233 = vmatpush1.bf16.msra.mxu0 %v195
    %234 = vmatprep.subr.bf16.mxu0 0
    %235 = vmatpush1.bf16.msra.mxu0 %v196
    %236 = vmatprep.subr.bf16.mxu0 0
    %237 = vmatpush1.bf16.msra.mxu0 %v197
    %238 = vmatprep.subr.bf16.mxu0 0
    %239 = vmatpush1.bf16.msra.mxu0 %v198
    %240 = vmatprep.subr.bf16.mxu0 0
    %241 = vmatpush1.bf16.msra.mxu0 %v199
    %242 = vmatprep.subr.bf16.mxu0 0
    %243 = vmatpush1.bf16.msra.mxu0 %v200
    %244 = vmatprep.subr.bf16.mxu0 0
    %245 = vmatpush1.bf16.msra.mxu0 %v201
    %246 = vmatprep.subr.bf16.mxu0 0
    %247 = vmatpush1.bf16.msra.mxu0 %v202
    %248 = vmatprep.subr.bf16.mxu0 0
    %249 = vmatpush1.bf16.msra.mxu0 %v203
    %250 = vmatprep.subr.bf16.mxu0 0
    %251 = vmatpush1.bf16.msra.mxu0 %v204
    %252 = vmatprep.subr.bf16.mxu0 0
    %253 = vmatpush1.bf16.msra.mxu0 %v205
    %254 = vmatprep.mubr.bf16.mxu0 %v119
    %255 = vmatmul.mubr.bf16.gmra.mrb[0].mxu0 %v118
    %v256 = vpop.f32.mrb[0].mxu0
    %v257 = vadd.f32 %v104, %v256
    %v258 = vpop.f32.mrb[0].mxu0
    %v259 = vpop.f32.mrb[0].mxu0
    %v260 = vadd.f32 %v104, %v259
    %v261 = vpop.f32.mrb[0].mxu0
    %262 = vmatprep.mubr.bf16.mxu0 %v121
    %263 = vmatmul.mubr.bf16.gmra.mrb[0].mxu0 %v120
    %v264 = vpop.f32.mrb[0].mxu0
    %v265 = vadd.f32 %v104, %v264
    %v266 = vpop.f32.mrb[0].mxu0
    %v267 = vpop.f32.mrb[0].mxu0
    %v268 = vadd.f32 %v104, %v267
    %v269 = vpop.f32.mrb[0].mxu0
    %270 = vdwg.mxu0
    %271 = vadd.xlane.f32.xlu0 %v257
    %v272 = vpop.xlane.xlu0 %271
    %273 = vadd.xlane.f32.xlu0 %v260
    %v274 = vpop.xlane.xlu0 %273
    %275 = vadd.xlane.f32.xlu0 %v265
    %v276 = vpop.xlane.xlu0 %275
    %277 = vadd.xlane.f32.xlu0 %v268
    %v278 = vpop.xlane.xlu0 %277
    %v279 = vmul.f32 %v257, %v257
    %v280 = vmul.f32 %v260, %v260
    %v281 = vmul.f32 %v265, %v265
    %v282 = vmul.f32 %v268, %v268
    %283 = vadd.xlane.f32.xlu0 %v279
    %v284 = vpop.xlane.xlu0 %283
    %285 = vadd.xlane.f32.xlu0 %v280
    %v286 = vpop.xlane.xlu0 %285
    %287 = vadd.xlane.f32.xlu0 %v281
    %v288 = vpop.xlane.xlu0 %287
    %289 = vadd.xlane.f32.xlu0 %v282
    %v290 = vpop.xlane.xlu0 %289
    %v291 = vmul.f32 %v272, 0.015625
    %v292 = vmul.f32 %v274, 0.015625
    %v293 = vmul.f32 %v276, 0.015625
    %v294 = vmul.f32 %v278, 0.015625
    %v295 = vmul.f32 %v284, 0.015625
    %v296 = vmul.f32 %v286, 0.015625
    %v297 = vmul.f32 %v288, 0.015625
    %v298 = vmul.f32 %v290, 0.015625
    %v299 = vmul.f32 %v291, %v291
    %v300 = vmul.f32 %v292, %v292
    %v301 = vmul.f32 %v293, %v293
    %v302 = vmul.f32 %v294, %v294
    %v303 = vsub.f32 %v295, %v299
    %v304 = vsub.f32 %v296, %v300
    %v305 = vsub.f32 %v297, %v301
    %v306 = vsub.f32 %v298, %v302
    %v307 = vsub.f32 %v257, %v291
    %v308 = vsub.f32 %v260, %v292
    %v309 = vsub.f32 %v265, %v293
    %v310 = vsub.f32 %v268, %v294
    %v311 = vadd.f32 %v303, 1e-05
    %v312 = vadd.f32 %v304, 1e-05
    %v313 = vadd.f32 %v305, 1e-05
    %v314 = vadd.f32 %v306, 1e-05
    %v315 = vrsqrt.pop %v311
    %v316 = vrsqrt.pop %v312
    %v317 = vrsqrt.pop %v313
    %v318 = vrsqrt.pop %v314
    %v319 = vmul.f32 %v307, %v315
    %v320 = vmul.f32 %v308, %v316
    %v321 = vmul.f32 %v309, %v317
    %v322 = vmul.f32 %v310, %v318
    %v323 = vpack.c.bf16 %v320, %v319
    %v324 = vpack.c.bf16 %v322, %v321
    %v325 = vld [vmem:[#allocation7] sm:$0xff]
    %v326 = vld [vmem:[#allocation7 + $0x8] sm:$0xff]
    %v327 = vld [vmem:[#allocation7 + $0x10] sm:$0xff]
    %v328 = vld [vmem:[#allocation7 + $0x18] sm:$0xff]
    %v329 = vld [vmem:[#allocation7 + $0x20] sm:$0xff]
    %v330 = vld [vmem:[#allocation7 + $0x28] sm:$0xff]
    %v331 = vld [vmem:[#allocation7 + $0x30] sm:$0xff]
    %v332 = vld [vmem:[#allocation7 + $0x38] sm:$0xff]
    %v333 = vld [vmem:[#allocation7 + $0x40] sm:$0xff]
    %v334 = vld [vmem:[#allocation7 + $0x48] sm:$0xff]
    %v335 = vld [vmem:[#allocation7 + $0x50] sm:$0xff]
    %v336 = vld [vmem:[#allocation7 + $0x58] sm:$0xff]
    %v337 = vld [vmem:[#allocation7 + $0x60] sm:$0xff]
    %v338 = vld [vmem:[#allocation7 + $0x68] sm:$0xff]
    %v339 = vld [vmem:[#allocation7 + $0x70] sm:$0xff]
    %v340 = vld [vmem:[#allocation7 + $0x78] sm:$0xff]
    %v341 = vld [vmem:[%s4] sm:$0x3]
    %v343 = vlaneseq
    %v344 = vshrl.u32 %v343, 7
    %v345 = vsub.s32 0, %v344
    %v346 = vrot.slane %v341, %v345
    %v347 = vlaneseq
    %v348 = vshrl.u32 %v347, 7
    %v349 = vsub.s32 1, %v348
    %v350 = vrot.slane %v341, %v349
    %v369 = vunpack.c.l.b16 %v325
    %v370 = vunpack.c.h.b16 %v325
    %v371 = vunpack.c.l.b16 %v326
    %v372 = vunpack.c.h.b16 %v326
    %v373 = vunpack.c.l.b16 %v327
    %v374 = vunpack.c.h.b16 %v327
    %v375 = vunpack.c.l.b16 %v328
    %v376 = vunpack.c.h.b16 %v328
    %v377 = vunpack.c.l.b16 %v329
    %v378 = vunpack.c.h.b16 %v329
    %v379 = vunpack.c.l.b16 %v330
    %v380 = vunpack.c.h.b16 %v330
    %v381 = vunpack.c.l.b16 %v331
    %v382 = vunpack.c.h.b16 %v331
    %v383 = vunpack.c.l.b16 %v332
    %v384 = vunpack.c.h.b16 %v332
    %v385 = vunpack.c.l.b16 %v333
    %v386 = vunpack.c.h.b16 %v333
    %v387 = vunpack.c.l.b16 %v334
    %v388 = vunpack.c.h.b16 %v334
    %v389 = vunpack.c.l.b16 %v335
    %v390 = vunpack.c.h.b16 %v335
    %v391 = vunpack.c.l.b16 %v336
    %v392 = vunpack.c.h.b16 %v336
    %v393 = vunpack.c.l.b16 %v337
    %v394 = vunpack.c.h.b16 %v337
    %v395 = vunpack.c.l.b16 %v338
    %v396 = vunpack.c.h.b16 %v338
    %v397 = vunpack.c.l.b16 %v339
    %v398 = vunpack.c.h.b16 %v339
    %v399 = vunpack.c.l.b16 %v340
    %v400 = vunpack.c.h.b16 %v340
    %v401 = vpack.c.b16 %v371, %v369
    %v402 = vpack.c.b16 %v372, %v370
    %v403 = vpack.c.b16 %v375, %v373
    %v404 = vpack.c.b16 %v376, %v374
    %v405 = vpack.c.b16 %v379, %v377
    %v406 = vpack.c.b16 %v380, %v378
    %v407 = vpack.c.b16 %v383, %v381
    %v408 = vpack.c.b16 %v384, %v382
    %v409 = vpack.c.b16 %v387, %v385
    %v410 = vpack.c.b16 %v388, %v386
    %v411 = vpack.c.b16 %v391, %v389
    %v412 = vpack.c.b16 %v392, %v390
    %v413 = vpack.c.b16 %v395, %v393
    %v414 = vpack.c.b16 %v396, %v394
    %v415 = vpack.c.b16 %v399, %v397
    %v416 = vpack.c.b16 %v400, %v398
    %433 = vmatprep.subr.bf16.mxu0 %v402
    %434 = vmatpush1.bf16.msra.mxu0 %v401
    %435 = vmatprep.subr.bf16.mxu0 %v404
    %436 = vmatpush1.bf16.msra.mxu0 %v403
    %437 = vmatprep.subr.bf16.mxu0 %v406
    %438 = vmatpush1.bf16.msra.mxu0 %v405
    %439 = vmatprep.subr.bf16.mxu0 %v408
    %440 = vmatpush1.bf16.msra.mxu0 %v407
    %441 = vmatprep.subr.bf16.mxu0 %v410
    %442 = vmatpush1.bf16.msra.mxu0 %v409
    %443 = vmatprep.subr.bf16.mxu0 %v412
    %444 = vmatpush1.bf16.msra.mxu0 %v411
    %445 = vmatprep.subr.bf16.mxu0 %v414
    %446 = vmatpush1.bf16.msra.mxu0 %v413
    %447 = vmatprep.subr.bf16.mxu0 %v416
    %448 = vmatpush1.bf16.msra.mxu0 %v415
    %449 = vmatprep.subr.bf16.mxu0 0
    %450 = vmatpush1.bf16.msra.mxu0 0
    %451 = vmatprep.subr.bf16.mxu0 0
    %452 = vmatpush1.bf16.msra.mxu0 0
    %453 = vmatprep.subr.bf16.mxu0 0
    %454 = vmatpush1.bf16.msra.mxu0 0
    %455 = vmatprep.subr.bf16.mxu0 0
    %456 = vmatpush1.bf16.msra.mxu0 0
    %457 = vmatprep.subr.bf16.mxu0 0
    %458 = vmatpush1.bf16.msra.mxu0 0
    %459 = vmatprep.subr.bf16.mxu0 0
    %460 = vmatpush1.bf16.msra.mxu0 0
    %461 = vmatprep.subr.bf16.mxu0 0
    %462 = vmatpush1.bf16.msra.mxu0 0
    %463 = vmatprep.subr.bf16.mxu0 0
    %464 = vmatpush1.bf16.msra.mxu0 0
    %465 = vmatprep.mubr.bf16.mxu0 0
    %466 = vmatmul.mubr.bf16.gmra.mrb[0].mxu0 %v323
    %v467 = vpop.f32.mrb[0].mxu0
    %v468 = vadd.f32 %v346, %v467
    %v469 = vpop.f32.mrb[0].mxu0
    %v470 = vadd.f32 %v350, %v469
    %v471 = vpop.f32.mrb[0].mxu0
    %v472 = vadd.f32 %v346, %v471
    %v473 = vpop.f32.mrb[0].mxu0
    %v474 = vadd.f32 %v350, %v473
    %475 = vmatprep.mubr.bf16.mxu0 0
    %476 = vmatmul.mubr.bf16.gmra.mrb[0].mxu0 %v324
    %v477 = vpop.f32.mrb[0].mxu0
    %v478 = vadd.f32 %v346, %v477
    %v479 = vpop.f32.mrb[0].mxu0
    %v480 = vadd.f32 %v350, %v479
    %v481 = vpop.f32.mrb[0].mxu0
    %v482 = vadd.f32 %v346, %v481
    %v483 = vpop.f32.mrb[0].mxu0
    %v484 = vadd.f32 %v350, %v483
    %485 = vdwg.mxu0
    %486 = vst [vmem:[#allocation8] sm:$0xff] %v468
    %487 = vst [vmem:[#allocation8 + $0x8] sm:$0xff] %v470
    %488 = vst [vmem:[#allocation8 + $0x10] sm:$0xff] %v472
    %489 = vst [vmem:[#allocation8 + $0x18] sm:$0xff] %v474
    %490 = vst [vmem:[#allocation8 + $0x20] sm:$0xff] %v478
    %491 = vst [vmem:[#allocation8 + $0x28] sm:$0xff] %v480
    %492 = vst [vmem:[#allocation8 + $0x30] sm:$0xff] %v482
    %493 = vst [vmem:[#allocation8 + $0x38] sm:$0xff] %v484
    // Predicated region
    $region34: #{tpu_custom_call.1} parent=1 // pred_check
      _
    $region35: #{tpu_custom_call.1} parent=1 // pred_check_branch
      %495 = sbr.rel (0) target = $region37
    $region36: #{tpu_custom_call.1} parent=1 // pred_region
      %s497 = ssub.s32 1024, 1024
      %498 = vsyncadd [#allocation4], %s497
      %s499 = sshll.u32 [#allocation8], 4
      %s500 = int_to_ptr.vmem [resolvable:$true] %s499
      %505 = dma.vmem_to_hbm [thread:$0]  %s500, 1024, %s5, [#allocation4], 256, 256, 16
    $region37: #{tpu_custom_call.1} parent=1 // pred_fallthru
      _
    // Predicated region
    $region38: #{tpu_custom_call.1} parent=1 // pred_check
      _
    $region39: #{tpu_custom_call.1} parent=1 // pred_check_branch
      %507 = sbr.rel (0) target = $region41
    $region40: #{tpu_custom_call.1} parent=1 // pred_region
      %508 = dma.done [#allocation4], 1024
    $region41: #{tpu_custom_call.1} parent=1 // pred_fallthru
      _
    %509 = vsyncpa [#allocation3], 1
    %510 = vsyncpa [#allocation6], 1
    %511 = vsyncpa [#allocation4], 1

</llo_original>
